<compile_context>
chip_gen: v7x
topology: tpu7x:2x2x1
jax: 0.10.0
libtpu: 0.0.40
codegen_flags: <defaults>
</compile_context>

<pallas_src>
import jax
import jax.numpy as jnp
from jax.experimental import pallas as pl
from jax.experimental.pallas import tpu as pltpu


def _round_up(v, m):
    return ((v + m - 1) // m) * m


def _cdiv(a, b):
    return -(-a // b)


def _probe_buffered_blockspec():
    # Capability probe: pipeline_mode=pl.Buffered(k) on BlockSpec (used to keep
    # the grid-invariant weight/bias blocks single-buffered in VMEM).
    try:
        pl.BlockSpec((8, 128), lambda i: (0, 0), pipeline_mode=pl.Buffered(1))
        return True
    except Exception:
        return False


_SINGLE_BUFFER_WEIGHTS = _probe_buffered_blockspec()


def _vmem_capacity_bytes():
    try:
        return int(pltpu.get_tpu_info().vmem_capacity_bytes)
    except Exception:
        return 64 * 1024 * 1024  # conservative (v7x-sized) fallback


# ---------------------------------------------------------------------------
# Kernels
# ---------------------------------------------------------------------------

def _mlp_resident_kernel(x_ref, w1_ref, b1_ref, w2_ref, b2_ref, o_ref):
    """Whole-MLP batch tile: both weight matrices resident in VMEM."""
    # In-kernel cast of the x tile to the MXU input dtype (no-op for f32); x
    # stays in its HBM dtype so there is no wrapper-side cast/pad pass.
    x = x_ref[...].astype(w1_ref.dtype)
    h = jnp.dot(x, w1_ref[...], preferred_element_type=jnp.float32)
    h = jnp.maximum(h + b1_ref[...], 0.0)            # f32 bias + ReLU epilogue
    y = jnp.dot(h.astype(w2_ref.dtype), w2_ref[...],
                preferred_element_type=jnp.float32)
    o_ref[...] = (y + b2_ref[...]).astype(o_ref.dtype)


def _mlp_hidden_tiled_kernel(x_ref, w1_ref, b1_ref, w2_ref, b2_ref, o_ref,
                             acc_ref):
    """Hidden-dim tiled fallback for layers whose weights don't fit VMEM."""
    j = pl.program_id(1)

    @pl.when(j == 0)
    def _():
        acc_ref[...] = jnp.zeros_like(acc_ref)

    x = x_ref[...].astype(w1_ref.dtype)
    h = jnp.dot(x, w1_ref[...], preferred_element_type=jnp.float32)
    h = jnp.maximum(h + b1_ref[...], 0.0)
    acc_ref[...] += jnp.dot(h.astype(w2_ref.dtype), w2_ref[...],
                            preferred_element_type=jnp.float32)

    @pl.when(j == pl.num_programs(1) - 1)
    def _():
        o_ref[...] = (acc_ref[...] + b2_ref[...]).astype(o_ref.dtype)


# ---------------------------------------------------------------------------
# Parameter preparation (hoisted out of the per-forward hot path)
# ---------------------------------------------------------------------------

def prepare_params(w1, b1, w2, b2, compute_dtype=None):
    """Pad/cast weights ONCE; reuse the result across forward calls.

    w1: (in, hidden)  b1: (hidden,)  w2: (hidden, out)  b2: (out,)
    The hidden dim is zero-padded to a 128-lane multiple (exact math: padded
    hidden units have zero w1 columns, zero bias and zero w2 rows).  Weight
    matrices are cast to `compute_dtype` (e.g. bf16 on v6e/v7x); biases f32.
    """
    in_f, hid = w1.shape
    hid2, out_f = w2.shape
    assert hid == hid2 and b1.shape == (hid,) and b2.shape == (out_f,)
    cdt = jnp.dtype(compute_dtype) if compute_dtype is not None else jnp.dtype(w1.dtype)
    hid_p = _round_up(hid, 128)

    if hid_p == hid:
        w1_p = w1.astype(cdt)
        w2_p = w2.astype(cdt)
        b1_p = b1.astype(jnp.float32).reshape(1, hid_p)
    else:
        w1_p = jnp.zeros((in_f, hid_p), cdt).at[:, :hid].set(w1.astype(cdt))
        w2_p = jnp.zeros((hid_p, out_f), cdt).at[:hid, :].set(w2.astype(cdt))
        b1_p = jnp.zeros((1, hid_p), jnp.float32).at[0, :hid].set(
            b1.astype(jnp.float32))
    b2_p = b2.astype(jnp.float32).reshape(1, out_f)
    return {"w1": w1_p, "b1": b1_p, "w2": w2_p, "b2": b2_p,
            "in_features": in_f, "hidden": hid, "out_features": out_f}


# ---------------------------------------------------------------------------
# Tiling helpers
# ---------------------------------------------------------------------------

def _pick_block_n(N, requested, row_align, budget, tile_bytes):
    if requested is not None:
        bn = max(row_align, _round_up(int(requested), row_align))
    else:
        bn = 512
        # Ensure >= 2 grid steps when the batch is big enough so the
        # "parallel" axis can be split across v7x's two TensorCores.
        if N >= 512:
            bn = min(bn, max(256, _round_up(_cdiv(N, 2), 256)))
    # Shrink to fit the VMEM budget: 256-row granularity while >= 256 (full
    # MXU row tiles on v6e/v7x), row_align granularity below that.
    while bn > row_align and tile_bytes(bn) > budget:
        nxt = bn // 2
        if nxt >= 256:
            nxt = _round_up(nxt, 256)
        else:
            nxt = max(row_align, _round_up(nxt, row_align))
        if nxt >= bn:
            nxt = bn - row_align
        bn = max(row_align, nxt)
    if bn >= N:
        bn = N          # single tile covering the whole batch (full-dim block)
    return bn


# ---------------------------------------------------------------------------
# Forward paths
# ---------------------------------------------------------------------------

def _forward_resident(x, w1_p, b1_p, w2_p, b2_p, out_dtype, block_n, row_align,
                      budget, capacity, weight_bytes):
    N, in_f = x.shape
    hid_p = w1_p.shape[1]
    out_f = w2_p.shape[1]
    x_item = jnp.dtype(x.dtype).itemsize
    c_item = jnp.dtype(w1_p.dtype).itemsize
    o_item = jnp.dtype(out_dtype).itemsize

    def tile_bytes(bn):
        io = 2 * bn * in_f * x_item + 2 * bn * out_f * o_item   # pipelined x/out
        inter = bn * hid_p * 4                                   # f32 hidden act
        if c_item != 4:
            inter += bn * (in_f + hid_p) * c_item                # in-kernel casts
        return io + inter + weight_bytes                         # weights resident

    bn = _pick_block_n(N, block_n, row_align, budget, tile_bytes)
    grid = (_cdiv(N, bn),)
    vmem_limit = int(min(capacity, max(32 * 1024 * 1024,
                                       tile_bytes(bn) * 5 // 4)))
    cost = pl.CostEstimate(
        flops=2 * N * (in_f * hid_p + hid_p * out_f),
        transcendentals=0,
        bytes_accessed=N * in_f * x_item + N * out_f * o_item + weight_bytes)

    def call(single_buffer_weights):
        def const_spec(shape):
            if single_buffer_weights:
                return pl.BlockSpec(shape, lambda i: (0, 0),
                                    pipeline_mode=pl.Buffered(1))
            return pl.BlockSpec(shape, lambda i: (0, 0))

        return pl.pallas_call(
            _mlp_resident_kernel,
            out_shape=jax.ShapeDtypeStruct((N, out_f), out_dtype),
            grid_spec=pltpu.PrefetchScalarGridSpec(
                num_scalar_prefetch=0,
                grid=grid,
                in_specs=[
                    pl.BlockSpec((bn, in_f), lambda i: (i, 0)),   # x (streamed)
                    const_spec((in_f, hid_p)),                    # w1 (resident)
                    const_spec((1, hid_p)),                       # b1
                    const_spec((hid_p, out_f)),                   # w2 (resident)
                    const_spec((1, out_f)),                       # b2
                ],
                out_specs=pl.BlockSpec((bn, out_f), lambda i: (i, 0)),
            ),
            compiler_params=pltpu.CompilerParams(
                dimension_semantics=("parallel",),
                vmem_limit_bytes=vmem_limit),
            cost_estimate=cost,
        )(x, w1_p, b1_p, w2_p, b2_p)

    try:
        return call(_SINGLE_BUFFER_WEIGHTS)
    except Exception:
        if not _SINGLE_BUFFER_WEIGHTS:
            raise
        return call(False)   # retry with default double-buffered weights


def _forward_hidden_tiled(x, w1_p, b1_p, w2_p, b2_p, out_dtype, block_n,
                          hidden_block, row_align, budget, capacity):
    N, in_f = x.shape
    hid_p = w1_p.shape[1]
    out_f = w2_p.shape[1]
    x_item = jnp.dtype(x.dtype).itemsize
    c_item = jnp.dtype(w1_p.dtype).itemsize
    o_item = jnp.dtype(out_dtype).itemsize

    # The hidden tile must divide the (128-padded) hidden dim exactly so no
    # grid step touches garbage weight columns/rows.
    if hidden_block is not None:
        ht = int(hidden_block)
        assert hid_p % ht == 0, "hidden_block must divide the padded hidden dim"
    else:
        ht = 128
        for cand in (2048, 1024, 512, 256):
            if hid_p % cand == 0:
                ht = cand
                break
        while ht > 128 and 2 * (in_f * ht + ht * out_f) * c_item > budget // 2:
            ht //= 2
    # TODO(synk): also tile the in_features (K) dim if a single (in_f, ht)
    # w1 tile still exceeds VMEM for extremely wide inputs.

    def tile_bytes(bn):
        wt = 2 * (in_f * ht + ht * out_f) * c_item + 2 * ht * 4 + out_f * 4
        io = 2 * bn * in_f * x_item + 2 * bn * out_f * o_item
        inter = bn * ht * 4 + bn * out_f * 4      # h tile + f32 accumulator
        if c_item != 4:
            inter += bn * (in_f + ht) * c_item
        return wt + io + inter

    bn = _pick_block_n(N, block_n, row_align, budget, tile_bytes)
    n_i = _cdiv(N, bn)
    grid = (n_i, hid_p // ht)
    vmem_limit = int(min(capacity, max(32 * 1024 * 1024,
                                       tile_bytes(bn) * 5 // 4)))
    weight_hbm = (in_f * hid_p + hid_p * out_f) * c_item + (hid_p + out_f) * 4
    cost = pl.CostEstimate(
        flops=2 * N * (in_f * hid_p + hid_p * out_f),
        transcendentals=0,
        bytes_accessed=(N * in_f * x_item + N * out_f * o_item
                        + n_i * weight_hbm))

    return pl.pallas_call(
        _mlp_hidden_tiled_kernel,
        out_shape=jax.ShapeDtypeStruct((N, out_f), out_dtype),
        grid_spec=pltpu.PrefetchScalarGridSpec(
            num_scalar_prefetch=0,
            grid=grid,
            in_specs=[
                pl.BlockSpec((bn, in_f), lambda i, j: (i, 0)),
                pl.BlockSpec((in_f, ht), lambda i, j: (0, j)),
                pl.BlockSpec((1, ht), lambda i, j: (0, j)),
                pl.BlockSpec((ht, out_f), lambda i, j: (j, 0)),
                pl.BlockSpec((1, out_f), lambda i, j: (0, 0)),
            ],
            out_specs=pl.BlockSpec((bn, out_f), lambda i, j: (i, 0)),
            scratch_shapes=[pltpu.VMEM((bn, out_f), jnp.float32)],
        ),
        compiler_params=pltpu.CompilerParams(
            dimension_semantics=("parallel", "arbitrary"),
            vmem_limit_bytes=vmem_limit),
        cost_estimate=cost,
    )(x, w1_p, b1_p, w2_p, b2_p)


def linear_regression_forward(x, params, *, block_n=None, hidden_block=None,
                              force_path=None):
    """Pallas TPU forward pass of LinearRegression using prepared params.

    x: (..., in_features) — leading dims are flattened for the kernel.
    params: output of prepare_params().
    """
    w1_p, b1_p = params["w1"], params["b1"]
    w2_p, b2_p = params["w2"], params["b2"]
    orig_shape = x.shape
    if x.ndim != 2:
        x = x.reshape(-1, orig_shape[-1])
    N, in_f = x.shape
    assert in_f == params["in_features"], "feature dim mismatch"
    hid_p = w1_p.shape[1]
    out_f = w2_p.shape[1]
    out_dtype = x.dtype

    x_item = jnp.dtype(x.dtype).itemsize
    c_item = jnp.dtype(w1_p.dtype).itemsize
    row_align = 16 if min(x_item, c_item) < 4 else 8

    # Generation-aware VMEM budget: ~80 MiB on v5e/v6e (128 MiB physical),
    # ~40 MiB on v7x (64 MiB physical).
    capacity = _vmem_capacity_bytes()
    budget = (capacity * 5) // 8

    weight_bufs = 1 if _SINGLE_BUFFER_WEIGHTS else 2
    weight_bytes = (in_f * hid_p + hid_p * out_f) * c_item + (hid_p + out_f) * 4

    if force_path is not None:
        use_resident = force_path == "resident"
    else:
        # Guard: if the full weights would eat most of the budget, fall back to
        # the hidden-dim tiled plan instead of collapsing block_n.
        use_resident = weight_bufs * weight_bytes <= budget // 2

    if use_resident:
        out = _forward_resident(x, w1_p, b1_p, w2_p, b2_p, out_dtype, block_n,
                                row_align, budget, capacity, weight_bytes)
    else:
        out = _forward_hidden_tiled(x, w1_p, b1_p, w2_p, b2_p, out_dtype,
                                    block_n, hidden_block, row_align, budget,
                                    capacity)
    if len(orig_shape) != 2:
        out = out.reshape(orig_shape[:-1] + (out_f,))
    return out


def linear_regression_apply(x, w1, b1, w2, b2, *, compute_dtype=None,
                            block_n=None, hidden_block=None, force_path=None):
    """One-shot convenience: prepare the weights and run the forward.
    For repeated inference call prepare_params() once and reuse it."""
    params = prepare_params(w1, b1, w2, b2, compute_dtype=compute_dtype)
    return linear_regression_forward(x, params, block_n=block_n,
                                     hidden_block=hidden_block,
                                     force_path=force_path)


def init_params(key, in_features, out_features, dtype=jnp.float32):
    """Deterministic init mimicking nn.Linear default (uniform +/- 1/sqrt(fan_in))."""
    hidden_features = in_features * 2
    k1, k2, k3, k4 = jax.random.split(key, 4)
    bound1 = 1.0 / (in_features ** 0.5)
    bound2 = 1.0 / (hidden_features ** 0.5)
    # stored pre-transposed: (in, out)
    w1 = jax.random.uniform(k1, (in_features, hidden_features),
                            minval=-bound1, maxval=bound1, dtype=dtype)
    b1 = jax.random.uniform(k2, (hidden_features,),
                            minval=-bound1, maxval=bound1, dtype=dtype)
    w2 = jax.random.uniform(k3, (hidden_features, out_features),
                            minval=-bound2, maxval=bound2, dtype=dtype)
    b2 = jax.random.uniform(k4, (out_features,),
                            minval=-bound2, maxval=bound2, dtype=dtype)
    return w1, b1, w2, b2


def _reference(x, w1, b1, w2, b2):
    return jnp.maximum(x @ w1 + b1, 0.0) @ w2 + b2


if __name__ == "__main__":
    key = jax.random.PRNGKey(0)
    kx, kp, kx2, kx3, kp3 = jax.random.split(key, 5)

    # Small shapes consistent with the module: in=32 -> hidden=64 -> out=16.
    N, in_features, out_features = 8, 32, 16
    x = jax.random.normal(kx, (N, in_features), dtype=jnp.float32)
    w1, b1, w2, b2 = init_params(kp, in_features, out_features)

    # Hot-path usage: pad/cast weights once, reuse across forward calls.
    params_f32 = prepare_params(w1, b1, w2, b2)

    # f32 path (exact vs reference), single tile.
    out = jax.block_until_ready(linear_regression_forward(x, params_f32))
    ref = _reference(x, w1, b1, w2, b2)
    assert out.shape == (N, out_features)
    assert jnp.allclose(out, ref, atol=1e-5, rtol=1e-5)

    # Multi-tile grid + non-divisible batch (ragged last tile, no x padding).
    N2 = 300
    x2 = jax.random.normal(kx2, (N2, in_features), dtype=jnp.float32)
    out2 = jax.block_until_ready(
        linear_regression_forward(x2, params_f32, block_n=128))
    ref2 = _reference(x2, w1, b1, w2, b2)
    assert out2.shape == (N2, out_features)
    assert jnp.allclose(out2, ref2, atol=1e-5, rtol=1e-5)

    # bf16 MXU-input variant: x stays f32 in HBM, cast per-tile in the kernel.
    params_bf16 = prepare_params(w1, b1, w2, b2, compute_dtype=jnp.bfloat16)
    out_bf16 = jax.block_until_ready(
        linear_regression_forward(x2, params_bf16, block_n=128))
    assert out_bf16.shape == (N2, out_features)
    assert jnp.allclose(out_bf16, ref2, atol=1e-1, rtol=1e-1)

    # Hidden-dim tiled fallback path (f32 accumulator across hidden tiles).
    N3, in3, out3 = 64, 128, 16          # hidden=256 -> two 128-wide hid tiles
    x3 = jax.random.normal(kx3, (N3, in3), dtype=jnp.float32)
    w1c, b1c, w2c, b2c = init_params(kp3, in3, out3)
    out3_arr = jax.block_until_ready(
        linear_regression_apply(x3, w1c, b1c, w2c, b2c,
                                force_path="hidden_tiled", hidden_block=128))
    ref3 = _reference(x3, w1c, b1c, w2c, b2c)
    assert out3_arr.shape == (N3, out3)
    assert jnp.allclose(out3_arr, ref3, atol=1e-3, rtol=1e-3)

    print("KERNEL_OK")
</pallas_src>

<mosaic_0001>
module attributes {stable_mosaic.version = 11 : i64} {
  func.func @_mlp_resident_kernel(%arg0: i32, %arg1: memref<8x32xf32, #tpu.memory_space<vmem>>, %arg2: memref<32x128xf32, #tpu.memory_space<vmem>>, %arg3: memref<1x128xf32, #tpu.memory_space<vmem>>, %arg4: memref<128x16xf32, #tpu.memory_space<vmem>>, %arg5: memref<1x16xf32, #tpu.memory_space<vmem>>, %arg6: memref<8x16xf32, #tpu.memory_space<vmem>>) attributes {dimension_semantics = [#tpu.dimension_semantics<parallel>], iteration_bounds = array<i64: 1>, scalar_prefetch = 0 : i64, scratch_operands = 0 : i64, tpu.core_type = #tpu.core_type<tc>, window_params = [{transform_indices = @transform_0, window_bounds = array<i64: 8, 32>}, {pipeline_mode = #tpu.pipeline_mode<synchronous>, transform_indices = @transform_1, window_bounds = array<i64: 32, 128>}, {pipeline_mode = #tpu.pipeline_mode<synchronous>, transform_indices = @transform_2, window_bounds = array<i64: 1, 128>}, {pipeline_mode = #tpu.pipeline_mode<synchronous>, transform_indices = @transform_3, window_bounds = array<i64: 128, 16>}, {pipeline_mode = #tpu.pipeline_mode<synchronous>, transform_indices = @transform_4, window_bounds = array<i64: 1, 16>}, {transform_indices = @transform_5, window_bounds = array<i64: 8, 16>}]} {
    %c0 = arith.constant 0 : index
    %c0_0 = arith.constant 0 : index
    %0 = vector.load %arg1[%c0, %c0_0] : memref<8x32xf32, #tpu.memory_space<vmem>>, vector<8x32xf32>
    %c0_1 = arith.constant 0 : index
    %c0_2 = arith.constant 0 : index
    %1 = vector.load %arg2[%c0_1, %c0_2] : memref<32x128xf32, #tpu.memory_space<vmem>>, vector<32x128xf32>
    %cst = arith.constant dense<0.000000e+00> : vector<8x128xf32>
    %2 = tpu.matmul %0, %1, %cst {dimension_numbers = #tpu.dot_dimension_numbers<[1], [0], [0], [1], [0, 0, 1, 1], [], []>} : vector<8x32xf32>, vector<32x128xf32>, vector<8x128xf32> -> vector<8x128xf32>
    %c0_3 = arith.constant 0 : index
    %c0_4 = arith.constant 0 : index
    %3 = vector.load %arg3[%c0_3, %c0_4] : memref<1x128xf32, #tpu.memory_space<vmem>>, vector<1x128xf32>
    %4 = vector.broadcast %3 : vector<1x128xf32> to vector<8x128xf32>
    %5 = arith.addf %2, %4 : vector<8x128xf32>
    %cst_5 = arith.constant 0.000000e+00 : f32
    %6 = vector.broadcast %cst_5 : f32 to vector<8x128xf32>
    %7 = arith.maximumf %5, %6 : vector<8x128xf32>
    %c0_6 = arith.constant 0 : index
    %c0_7 = arith.constant 0 : index
    %8 = vector.load %arg4[%c0_6, %c0_7] : memref<128x16xf32, #tpu.memory_space<vmem>>, vector<128x16xf32>
    %cst_8 = arith.constant dense<0.000000e+00> : vector<8x16xf32>
    %9 = tpu.matmul %7, %8, %cst_8 {dimension_numbers = #tpu.dot_dimension_numbers<[1], [0], [0], [1], [0, 0, 1, 1], [], []>} : vector<8x128xf32>, vector<128x16xf32>, vector<8x16xf32> -> vector<8x16xf32>
    %c0_9 = arith.constant 0 : index
    %c0_10 = arith.constant 0 : index
    %10 = vector.load %arg5[%c0_9, %c0_10] : memref<1x16xf32, #tpu.memory_space<vmem>>, vector<1x16xf32>
    %11 = vector.broadcast %10 : vector<1x16xf32> to vector<8x16xf32>
    %12 = arith.addf %9, %11 : vector<8x16xf32>
    %c0_11 = arith.constant 0 : index
    %c0_12 = arith.constant 0 : index
    %13 = vector.load %arg6[%c0_11, %c0_12] : memref<8x16xf32, #tpu.memory_space<vmem>>, vector<8x16xf32>
    tpu.vector_store %arg6[%c0_11, %c0_12], %12 {strides = array<i32>} : memref<8x16xf32, #tpu.memory_space<vmem>>, vector<8x16xf32>,
    return
  }
  func.func @transform_0(%arg0: i32) -> (i32, i32) {
    %c0_i32 = arith.constant 0 : i32
    %c0_i32_0 = arith.constant 0 : i32
    return %arg0, %c0_i32 : i32, i32
  }
  func.func @transform_1(%arg0: i32) -> (i32, i32) {
    %c0_i32 = arith.constant 0 : i32
    %c0_i32_0 = arith.constant 0 : i32
    %c0_i32_1 = arith.constant 0 : i32
    return %c0_i32, %c0_i32_0 : i32, i32
  }
  func.func @transform_2(%arg0: i32) -> (i32, i32) {
    %c0_i32 = arith.constant 0 : i32
    %c0_i32_0 = arith.constant 0 : i32
    %c0_i32_1 = arith.constant 0 : i32
    return %c0_i32, %c0_i32_0 : i32, i32
  }
  func.func @transform_3(%arg0: i32) -> (i32, i32) {
    %c0_i32 = arith.constant 0 : i32
    %c0_i32_0 = arith.constant 0 : i32
    %c0_i32_1 = arith.constant 0 : i32
    return %c0_i32, %c0_i32_0 : i32, i32
  }
  func.func @transform_4(%arg0: i32) -> (i32, i32) {
    %c0_i32 = arith.constant 0 : i32
    %c0_i32_0 = arith.constant 0 : i32
    %c0_i32_1 = arith.constant 0 : i32
    return %c0_i32, %c0_i32_0 : i32, i32
  }
  func.func @transform_5(%arg0: i32) -> (i32, i32) {
    %c0_i32 = arith.constant 0 : i32
    %c0_i32_0 = arith.constant 0 : i32
    return %arg0, %c0_i32 : i32, i32
  }
}

module attributes {stable_mosaic.version = 11 : i64} {
  func.func @_mlp_resident_kernel(%arg0: i32, %arg1: memref<8x32xf32, #tpu.memory_space<vmem>>, %arg2: memref<32x128xf32, #tpu.memory_space<vmem>>, %arg3: memref<1x128xf32, #tpu.memory_space<vmem>>, %arg4: memref<128x16xf32, #tpu.memory_space<vmem>>, %arg5: memref<1x16xf32, #tpu.memory_space<vmem>>, %arg6: memref<8x16xf32, #tpu.memory_space<vmem>>) attributes {dimension_semantics = [#tpu.dimension_semantics<parallel>], iteration_bounds = array<i64: 1>, scalar_prefetch = 0 : i64, scratch_operands = 0 : i64, tpu.core_type = #tpu.core_type<tc>, window_params = [{transform_indices = @transform_0, window_bounds = array<i64: 8, 32>}, {pipeline_mode = #tpu.pipeline_mode<synchronous>, transform_indices = @transform_1, window_bounds = array<i64: 32, 128>}, {pipeline_mode = #tpu.pipeline_mode<synchronous>, transform_indices = @transform_2, window_bounds = array<i64: 1, 128>}, {pipeline_mode = #tpu.pipeline_mode<synchronous>, transform_indices = @transform_3, window_bounds = array<i64: 128, 16>}, {pipeline_mode = #tpu.pipeline_mode<synchronous>, transform_indices = @transform_4, window_bounds = array<i64: 1, 16>}, {transform_indices = @transform_5, window_bounds = array<i64: 8, 16>}]} {
    %c0 = arith.constant 0 : index
    %c0_0 = arith.constant 0 : index
    %0 = vector.load %arg1[%c0, %c0_0] : memref<8x32xf32, #tpu.memory_space<vmem>>, vector<8x32xf32>
    %c0_1 = arith.constant 0 : index
    %c0_2 = arith.constant 0 : index
    %1 = vector.load %arg2[%c0_1, %c0_2] : memref<32x128xf32, #tpu.memory_space<vmem>>, vector<32x128xf32>
    %cst = arith.constant dense<0.000000e+00> : vector<8x128xf32>
    %2 = tpu.matmul %0, %1, %cst {dimension_numbers = #tpu.dot_dimension_numbers<[1], [0], [0], [1], [0, 0, 1, 1], [], []>} : vector<8x32xf32>, vector<32x128xf32>, vector<8x128xf32> -> vector<8x128xf32>
    %c0_3 = arith.constant 0 : index
    %c0_4 = arith.constant 0 : index
    %3 = vector.load %arg3[%c0_3, %c0_4] : memref<1x128xf32, #tpu.memory_space<vmem>>, vector<1x128xf32>
    %4 = vector.broadcast %3 : vector<1x128xf32> to vector<8x128xf32>
    %5 = arith.addf %2, %4 : vector<8x128xf32>
    %cst_5 = arith.constant 0.000000e+00 : f32
    %6 = vector.broadcast %cst_5 : f32 to vector<8x128xf32>
    %7 = arith.maximumf %5, %6 : vector<8x128xf32>
    %c0_6 = arith.constant 0 : index
    %c0_7 = arith.constant 0 : index
    %8 = vector.load %arg4[%c0_6, %c0_7] : memref<128x16xf32, #tpu.memory_space<vmem>>, vector<128x16xf32>
    %cst_8 = arith.constant dense<0.000000e+00> : vector<8x16xf32>
    %9 = tpu.matmul %7, %8, %cst_8 {dimension_numbers = #tpu.dot_dimension_numbers<[1], [0], [0], [1], [0, 0, 1, 1], [], []>} : vector<8x128xf32>, vector<128x16xf32>, vector<8x16xf32> -> vector<8x16xf32>
    %c0_9 = arith.constant 0 : index
    %c0_10 = arith.constant 0 : index
    %10 = vector.load %arg5[%c0_9, %c0_10] : memref<1x16xf32, #tpu.memory_space<vmem>>, vector<1x16xf32>
    %11 = vector.broadcast %10 : vector<1x16xf32> to vector<8x16xf32>
    %12 = arith.addf %9, %11 : vector<8x16xf32>
    %c0_11 = arith.constant 0 : index
    %c0_12 = arith.constant 0 : index
    %13 = vector.load %arg6[%c0_11, %c0_12] : memref<8x16xf32, #tpu.memory_space<vmem>>, vector<8x16xf32>
    tpu.vector_store %arg6[%c0_11, %c0_12], %12 {strides = array<i32>} : memref<8x16xf32, #tpu.memory_space<vmem>>, vector<8x16xf32>,
    return
  }
  func.func @transform_0(%arg0: i32) -> (i32, i32) {
    %c0_i32 = arith.constant 0 : i32
    %c0_i32_0 = arith.constant 0 : i32
    return %arg0, %c0_i32 : i32, i32
  }
  func.func @transform_1(%arg0: i32) -> (i32, i32) {
    %c0_i32 = arith.constant 0 : i32
    %c0_i32_0 = arith.constant 0 : i32
    %c0_i32_1 = arith.constant 0 : i32
    return %c0_i32, %c0_i32_0 : i32, i32
  }
  func.func @transform_2(%arg0: i32) -> (i32, i32) {
    %c0_i32 = arith.constant 0 : i32
    %c0_i32_0 = arith.constant 0 : i32
    %c0_i32_1 = arith.constant 0 : i32
    return %c0_i32, %c0_i32_0 : i32, i32
  }
  func.func @transform_3(%arg0: i32) -> (i32, i32) {
    %c0_i32 = arith.constant 0 : i32
    %c0_i32_0 = arith.constant 0 : i32
    %c0_i32_1 = arith.constant 0 : i32
    return %c0_i32, %c0_i32_0 : i32, i32
  }
  func.func @transform_4(%arg0: i32) -> (i32, i32) {
    %c0_i32 = arith.constant 0 : i32
    %c0_i32_0 = arith.constant 0 : i32
    %c0_i32_1 = arith.constant 0 : i32
    return %c0_i32, %c0_i32_0 : i32, i32
  }
  func.func @transform_5(%arg0: i32) -> (i32, i32) {
    %c0_i32 = arith.constant 0 : i32
    %c0_i32_0 = arith.constant 0 : i32
    return %arg0, %c0_i32 : i32, i32
  }
}

</mosaic_0001>

<llo_original>
// kernel: tpu_custom_call.1
$region0: #{tpu_custom_call.1}
  #allocation0 [shape = 'u32[]', space=smem, size = 0x4, offset = 0x4, fixed_abs, tag = 'smem constant byte address 0x4 - core index']
  #allocation1 [shape = 'u32[144,128]{1,0:T(1,128)}', space=vmem, size = 0x12000, scoped, tag = 'internal scratch']
  %s0 = inlined_call_operand.vmem [shape: f32[8,32], index: 0, kind: input, shape index: {}]
  %s1 = inlined_call_operand.vmem [shape: f32[32,128], index: 1, kind: input, shape index: {}]
  %s2 = inlined_call_operand.vmem [shape: f32[1,128], index: 2, kind: input, shape index: {}]
  %s3 = inlined_call_operand.vmem [shape: f32[128,16], index: 3, kind: input, shape index: {}]
  %s4 = inlined_call_operand.vmem [shape: f32[1,16], index: 4, kind: input, shape index: {}]
  %s5 = inlined_call_operand.hbm [shape: f32[8,16], index: 5, kind: output, shape index: {}]
  %s6 = sld [smem:[#allocation0]]
  $region30: #{tpu_custom_call.1} parent=0
    _
  %s8 = ssub.s32 1, %s6
  %s9 = scalar_select 0, %s8, %s6
  $region1: #{tpu_custom_call.1} parent=0
    #allocation2 [shape = 'u8[4096]{0}', space=vmem, size = 0x1000, scoped, tag = 'output window, operand 0, single buffered']
    #allocation3 [shape = 's32[1]{0}', space=sflag, size = 0x4, scoped, tag = 'scoped memory for tpu_custom_call.1']
    %10 = vsyncpa [#allocation3], 0
    // Predicated region
    $region2: #{tpu_custom_call.1} parent=1 // pred_check
      _
    $region3: #{tpu_custom_call.1} parent=1 // pred_check_branch
      %12 = sbr.rel (0) target = $region5
    $region4: #{tpu_custom_call.1} parent=1 // pred_region
      _
    $region5: #{tpu_custom_call.1} parent=1 // pred_fallthru
      _
    // Predicated region
    $region6: #{tpu_custom_call.1} parent=1 // pred_check
      _
    $region7: #{tpu_custom_call.1} parent=1 // pred_check_branch
      %14 = sbr.rel (0) target = $region9
    $region8: #{tpu_custom_call.1} parent=1 // pred_region
      _
    $region9: #{tpu_custom_call.1} parent=1 // pred_fallthru
      _
    // Predicated region
    $region10: #{tpu_custom_call.1} parent=1 // pred_check
      _
    $region11: #{tpu_custom_call.1} parent=1 // pred_check_branch
      %16 = sbr.rel (0) target = $region13
    $region12: #{tpu_custom_call.1} parent=1 // pred_region
      _
    $region13: #{tpu_custom_call.1} parent=1 // pred_fallthru
      _
    // Predicated region
    $region14: #{tpu_custom_call.1} parent=1 // pred_check
      _
    $region15: #{tpu_custom_call.1} parent=1 // pred_check_branch
      %18 = sbr.rel (0) target = $region17
    $region16: #{tpu_custom_call.1} parent=1 // pred_region
      _
    $region17: #{tpu_custom_call.1} parent=1 // pred_fallthru
      _
    // Predicated region
    $region18: #{tpu_custom_call.1} parent=1 // pred_check
      _
    $region19: #{tpu_custom_call.1} parent=1 // pred_check_branch
      %20 = sbr.rel (0) target = $region21
    $region20: #{tpu_custom_call.1} parent=1 // pred_region
      _
    $region21: #{tpu_custom_call.1} parent=1 // pred_fallthru
      _
    %v21 = vld [vmem:[%s0] sm:$0xff]
    %v22 = vld [vmem:[%s1] sm:$0xff]
    %v23 = vld [vmem:[%s1 + $0x8] sm:$0xff]
    %v24 = vld [vmem:[%s1 + $0x10] sm:$0xff]
    %v25 = vld [vmem:[%s1 + $0x18] sm:$0xff]
    %v26 = vld [vmem:[%s2] sm:$0x1]
    %v28 = vlaneseq
    %v29 = vshrl.u32 %v28, 7
    %v30 = vsub.s32 0, %v29
    %v31 = vrot.slane %v26, %v30
    %vm33 = vcmask 261120
    %v35 = vsel %vm33, %v21, 0
    %37 = vmatprep.subr.mxu0 0.0
    %38 = vmatpush1.msra.mxu0 %v22
    %39 = vmatprep.subr.mxu0 0.0
    %40 = vmatpush1.msra.mxu0 %v23
    %41 = vmatprep.subr.mxu0 0.0
    %42 = vmatpush1.msra.mxu0 %v24
    %43 = vmatprep.subr.mxu0 0.0
    %44 = vmatpush1.msra.mxu0 %v25
    %45 = vmatprep.subr.mxu0 0.0
    %46 = vmatpush1.msra.mxu0 0.0
    %47 = vmatprep.subr.mxu0 0.0
    %48 = vmatpush1.msra.mxu0 0.0
    %49 = vmatprep.subr.mxu0 0.0
    %50 = vmatpush1.msra.mxu0 0.0
    %51 = vmatprep.subr.mxu0 0.0
    %52 = vmatpush1.msra.mxu0 0.0
    %53 = vmatprep.subr.mxu0 0.0
    %54 = vmatpush1.msra.mxu0 0.0
    %55 = vmatprep.subr.mxu0 0.0
    %56 = vmatpush1.msra.mxu0 0.0
    %57 = vmatprep.subr.mxu0 0.0
    %58 = vmatpush1.msra.mxu0 0.0
    %59 = vmatprep.subr.mxu0 0.0
    %60 = vmatpush1.msra.mxu0 0.0
    %61 = vmatprep.subr.mxu0 0.0
    %62 = vmatpush1.msra.mxu0 0.0
    %63 = vmatprep.subr.mxu0 0.0
    %64 = vmatpush1.msra.mxu0 0.0
    %65 = vmatprep.subr.mxu0 0.0
    %66 = vmatpush1.msra.mxu0 0.0
    %67 = vmatprep.subr.mxu0 0.0
    %68 = vmatpush1.msra.mxu0 0.0
    %69 = vmatprep.subr.mxu0 0.0
    %70 = vmatpush1.msra.mxu0 0.0
    %71 = vmatprep.subr.mxu0 0.0
    %72 = vmatpush1.msra.mxu0 0.0
    %73 = vmatprep.subr.mxu0 0.0
    %74 = vmatpush1.msra.mxu0 0.0
    %75 = vmatprep.subr.mxu0 0.0
    %76 = vmatpush1.msra.mxu0 0.0
    %77 = vmatprep.subr.mxu0 0.0
    %78 = vmatpush1.msra.mxu0 0.0
    %79 = vmatprep.subr.mxu0 0.0
    %80 = vmatpush1.msra.mxu0 0.0
    %81 = vmatprep.subr.mxu0 0.0
    %82 = vmatpush1.msra.mxu0 0.0
    %83 = vmatprep.subr.mxu0 0.0
    %84 = vmatpush1.msra.mxu0 0.0
    %85 = vmatprep.subr.mxu0 0.0
    %86 = vmatpush1.msra.mxu0 0.0
    %87 = vmatprep.subr.mxu0 0.0
    %88 = vmatpush1.msra.mxu0 0.0
    %89 = vmatprep.subr.mxu0 0.0
    %90 = vmatpush1.msra.mxu0 0.0
    %91 = vmatprep.subr.mxu0 0.0
    %92 = vmatpush1.msra.mxu0 0.0
    %93 = vmatprep.subr.mxu0 0.0
    %94 = vmatpush1.msra.mxu0 0.0
    %95 = vmatprep.subr.mxu0 0.0
    %96 = vmatpush1.msra.mxu0 0.0
    %97 = vmatprep.subr.mxu0 0.0
    %98 = vmatpush1.msra.mxu0 0.0
    %99 = vmatprep.subr.mxu0 0.0
    %100 = vmatpush1.msra.mxu0 0.0
    %101 = vmatprep.mubr.f32.mxu0 0.0
    %102 = vmatmul.mubr.f32.gmra.mrb[0].mxu0 %v35
    %v103 = vpop.f32.mrb[0].mxu0
    %v104 = vadd.f32 %v31, %v103
    %v105 = vpop.f32.mrb[0].mxu0
    %106 = vdwg.mxu0
    %v107 = vmax.f32 %v104, 0.0
    %v108 = vld [vmem:[%s3] sm:$0xff]
    %v109 = vld [vmem:[%s3 + $0x8] sm:$0xff]
    %v110 = vld [vmem:[%s3 + $0x10] sm:$0xff]
    %v111 = vld [vmem:[%s3 + $0x18] sm:$0xff]
    %v112 = vld [vmem:[%s3 + $0x20] sm:$0xff]
    %v113 = vld [vmem:[%s3 + $0x28] sm:$0xff]
    %v114 = vld [vmem:[%s3 + $0x30] sm:$0xff]
    %v115 = vld [vmem:[%s3 + $0x38] sm:$0xff]
    %v116 = vld [vmem:[%s3 + $0x40] sm:$0xff]
    %v117 = vld [vmem:[%s3 + $0x48] sm:$0xff]
    %v118 = vld [vmem:[%s3 + $0x50] sm:$0xff]
    %v119 = vld [vmem:[%s3 + $0x58] sm:$0xff]
    %v120 = vld [vmem:[%s3 + $0x60] sm:$0xff]
    %v121 = vld [vmem:[%s3 + $0x68] sm:$0xff]
    %v122 = vld [vmem:[%s3 + $0x70] sm:$0xff]
    %v123 = vld [vmem:[%s3 + $0x78] sm:$0xff]
    %v124 = vld [vmem:[%s4] sm:$0x1]
    %v126 = vlaneseq
    %v127 = vshrl.u32 %v126, 7
    %v128 = vsub.s32 0, %v127
    %v129 = vrot.slane %v124, %v128
    %131 = vmatprep.subr.mxu0 0.0
    %132 = vmatpush1.msra.mxu0 %v108
    %133 = vmatprep.subr.mxu0 0.0
    %134 = vmatpush1.msra.mxu0 %v109
    %135 = vmatprep.subr.mxu0 0.0
    %136 = vmatpush1.msra.mxu0 %v110
    %137 = vmatprep.subr.mxu0 0.0
    %138 = vmatpush1.msra.mxu0 %v111
    %139 = vmatprep.subr.mxu0 0.0
    %140 = vmatpush1.msra.mxu0 %v112
    %141 = vmatprep.subr.mxu0 0.0
    %142 = vmatpush1.msra.mxu0 %v113
    %143 = vmatprep.subr.mxu0 0.0
    %144 = vmatpush1.msra.mxu0 %v114
    %145 = vmatprep.subr.mxu0 0.0
    %146 = vmatpush1.msra.mxu0 %v115
    %147 = vmatprep.subr.mxu0 0.0
    %148 = vmatpush1.msra.mxu0 %v116
    %149 = vmatprep.subr.mxu0 0.0
    %150 = vmatpush1.msra.mxu0 %v117
    %151 = vmatprep.subr.mxu0 0.0
    %152 = vmatpush1.msra.mxu0 %v118
    %153 = vmatprep.subr.mxu0 0.0
    %154 = vmatpush1.msra.mxu0 %v119
    %155 = vmatprep.subr.mxu0 0.0
    %156 = vmatpush1.msra.mxu0 %v120
    %157 = vmatprep.subr.mxu0 0.0
    %158 = vmatpush1.msra.mxu0 %v121
    %159 = vmatprep.subr.mxu0 0.0
    %160 = vmatpush1.msra.mxu0 %v122
    %161 = vmatprep.subr.mxu0 0.0
    %162 = vmatpush1.msra.mxu0 %v123
    %163 = vmatprep.subr.mxu0 0.0
    %164 = vmatpush1.msra.mxu0 0.0
    %165 = vmatprep.subr.mxu0 0.0
    %166 = vmatpush1.msra.mxu0 0.0
    %167 = vmatprep.subr.mxu0 0.0
    %168 = vmatpush1.msra.mxu0 0.0
    %169 = vmatprep.subr.mxu0 0.0
    %170 = vmatpush1.msra.mxu0 0.0
    %171 = vmatprep.subr.mxu0 0.0
    %172 = vmatpush1.msra.mxu0 0.0
    %173 = vmatprep.subr.mxu0 0.0
    %174 = vmatpush1.msra.mxu0 0.0
    %175 = vmatprep.subr.mxu0 0.0
    %176 = vmatpush1.msra.mxu0 0.0
    %177 = vmatprep.subr.mxu0 0.0
    %178 = vmatpush1.msra.mxu0 0.0
    %179 = vmatprep.subr.mxu0 0.0
    %180 = vmatpush1.msra.mxu0 0.0
    %181 = vmatprep.subr.mxu0 0.0
    %182 = vmatpush1.msra.mxu0 0.0
    %183 = vmatprep.subr.mxu0 0.0
    %184 = vmatpush1.msra.mxu0 0.0
    %185 = vmatprep.subr.mxu0 0.0
    %186 = vmatpush1.msra.mxu0 0.0
    %187 = vmatprep.subr.mxu0 0.0
    %188 = vmatpush1.msra.mxu0 0.0
    %189 = vmatprep.subr.mxu0 0.0
    %190 = vmatpush1.msra.mxu0 0.0
    %191 = vmatprep.subr.mxu0 0.0
    %192 = vmatpush1.msra.mxu0 0.0
    %193 = vmatprep.subr.mxu0 0.0
    %194 = vmatpush1.msra.mxu0 0.0
    %195 = vmatprep.mubr.f32.mxu0 0.0
    %196 = vmatmul.mubr.f32.gmra.mrb[0].mxu0 %v107
    %v197 = vpop.f32.mrb[0].mxu0
    %v198 = vadd.f32 %v129, %v197
    %v199 = vpop.f32.mrb[0].mxu0
    %200 = vdwg.mxu0
    %vm201 = vcmask 130048
    %202 = vst.msk [vmem:[#allocation2] sm:$0xff] %vm201, %v198
    // Predicated region
    $region22: #{tpu_custom_call.1} parent=1 // pred_check
      _
    $region23: #{tpu_custom_call.1} parent=1 // pred_check_branch
      %204 = sbr.rel (0) target = $region25
    $region24: #{tpu_custom_call.1} parent=1 // pred_region
      %s206 = ssub.s32 128, 128
      %207 = vsyncadd [#allocation3], %s206
      %s209 = sshll.u32 [#allocation2], 4
      %s210 = int_to_ptr.vmem [resolvable:$true] %s209
      %212 = dma.vmem_to_hbm [thread:$0]  %s210, 128, %s5, [#allocation3]
    $region25: #{tpu_custom_call.1} parent=1 // pred_fallthru
      _
    // Predicated region
    $region26: #{tpu_custom_call.1} parent=1 // pred_check
      _
    $region27: #{tpu_custom_call.1} parent=1 // pred_check_branch
      %214 = sbr.rel (0) target = $region29
    $region28: #{tpu_custom_call.1} parent=1 // pred_region
      %215 = dma.done [#allocation3], 128
    $region29: #{tpu_custom_call.1} parent=1 // pred_fallthru
      _
    %216 = vsyncpa [#allocation3], 1

// kernel: tpu_custom_call.1
$region0: #{tpu_custom_call.1}
  #allocation0 [shape = 'u32[]', space=smem, size = 0x4, offset = 0x4, fixed_abs, tag = 'smem constant byte address 0x4 - core index']
  #allocation1 [shape = 'u32[144,128]{1,0:T(1,128)}', space=vmem, size = 0x12000, scoped, tag = 'internal scratch']
  %s0 = inlined_call_operand.vmem [shape: f32[8,32], index: 0, kind: input, shape index: {}]
  %s1 = inlined_call_operand.vmem [shape: f32[32,128], index: 1, kind: input, shape index: {}]
  %s2 = inlined_call_operand.vmem [shape: f32[1,128], index: 2, kind: input, shape index: {}]
  %s3 = inlined_call_operand.vmem [shape: f32[128,16], index: 3, kind: input, shape index: {}]
  %s4 = inlined_call_operand.vmem [shape: f32[1,16], index: 4, kind: input, shape index: {}]
  %s5 = inlined_call_operand.hbm [shape: f32[8,16], index: 5, kind: output, shape index: {}]
  %s6 = sld [smem:[#allocation0]]
  $region30: #{tpu_custom_call.1} parent=0
    _
  %s8 = ssub.s32 1, %s6
  %s9 = scalar_select 0, %s8, %s6
  $region1: #{tpu_custom_call.1} parent=0
    #allocation2 [shape = 'u8[4096]{0}', space=vmem, size = 0x1000, scoped, tag = 'output window, operand 0, single buffered']
    #allocation3 [shape = 's32[1]{0}', space=sflag, size = 0x4, scoped, tag = 'scoped memory for tpu_custom_call.1']
    %10 = vsyncpa [#allocation3], 0
    // Predicated region
    $region2: #{tpu_custom_call.1} parent=1 // pred_check
      _
    $region3: #{tpu_custom_call.1} parent=1 // pred_check_branch
      %12 = sbr.rel (0) target = $region5
    $region4: #{tpu_custom_call.1} parent=1 // pred_region
      _
    $region5: #{tpu_custom_call.1} parent=1 // pred_fallthru
      _
    // Predicated region
    $region6: #{tpu_custom_call.1} parent=1 // pred_check
      _
    $region7: #{tpu_custom_call.1} parent=1 // pred_check_branch
      %14 = sbr.rel (0) target = $region9
    $region8: #{tpu_custom_call.1} parent=1 // pred_region
      _
    $region9: #{tpu_custom_call.1} parent=1 // pred_fallthru
      _
    // Predicated region
    $region10: #{tpu_custom_call.1} parent=1 // pred_check
      _
    $region11: #{tpu_custom_call.1} parent=1 // pred_check_branch
      %16 = sbr.rel (0) target = $region13
    $region12: #{tpu_custom_call.1} parent=1 // pred_region
      _
    $region13: #{tpu_custom_call.1} parent=1 // pred_fallthru
      _
    // Predicated region
    $region14: #{tpu_custom_call.1} parent=1 // pred_check
      _
    $region15: #{tpu_custom_call.1} parent=1 // pred_check_branch
      %18 = sbr.rel (0) target = $region17
    $region16: #{tpu_custom_call.1} parent=1 // pred_region
      _
    $region17: #{tpu_custom_call.1} parent=1 // pred_fallthru
      _
    // Predicated region
    $region18: #{tpu_custom_call.1} parent=1 // pred_check
      _
    $region19: #{tpu_custom_call.1} parent=1 // pred_check_branch
      %20 = sbr.rel (0) target = $region21
    $region20: #{tpu_custom_call.1} parent=1 // pred_region
      _
    $region21: #{tpu_custom_call.1} parent=1 // pred_fallthru
      _
    %v21 = vld [vmem:[%s0] sm:$0xff]
    %v22 = vld [vmem:[%s1] sm:$0xff]
    %v23 = vld [vmem:[%s1 + $0x8] sm:$0xff]
    %v24 = vld [vmem:[%s1 + $0x10] sm:$0xff]
    %v25 = vld [vmem:[%s1 + $0x18] sm:$0xff]
    %v26 = vld [vmem:[%s2] sm:$0x1]
    %v28 = vlaneseq
    %v29 = vshrl.u32 %v28, 7
    %v30 = vsub.s32 0, %v29
    %v31 = vrot.slane %v26, %v30
    %vm33 = vcmask 261120
    %v35 = vsel %vm33, %v21, 0
    %37 = vmatprep.subr.mxu0 0.0
    %38 = vmatpush1.msra.mxu0 %v22
    %39 = vmatprep.subr.mxu0 0.0
    %40 = vmatpush1.msra.mxu0 %v23
    %41 = vmatprep.subr.mxu0 0.0
    %42 = vmatpush1.msra.mxu0 %v24
    %43 = vmatprep.subr.mxu0 0.0
    %44 = vmatpush1.msra.mxu0 %v25
    %45 = vmatprep.subr.mxu0 0.0
    %46 = vmatpush1.msra.mxu0 0.0
    %47 = vmatprep.subr.mxu0 0.0
    %48 = vmatpush1.msra.mxu0 0.0
    %49 = vmatprep.subr.mxu0 0.0
    %50 = vmatpush1.msra.mxu0 0.0
    %51 = vmatprep.subr.mxu0 0.0
    %52 = vmatpush1.msra.mxu0 0.0
    %53 = vmatprep.subr.mxu0 0.0
    %54 = vmatpush1.msra.mxu0 0.0
    %55 = vmatprep.subr.mxu0 0.0
    %56 = vmatpush1.msra.mxu0 0.0
    %57 = vmatprep.subr.mxu0 0.0
    %58 = vmatpush1.msra.mxu0 0.0
    %59 = vmatprep.subr.mxu0 0.0
    %60 = vmatpush1.msra.mxu0 0.0
    %61 = vmatprep.subr.mxu0 0.0
    %62 = vmatpush1.msra.mxu0 0.0
    %63 = vmatprep.subr.mxu0 0.0
    %64 = vmatpush1.msra.mxu0 0.0
    %65 = vmatprep.subr.mxu0 0.0
    %66 = vmatpush1.msra.mxu0 0.0
    %67 = vmatprep.subr.mxu0 0.0
    %68 = vmatpush1.msra.mxu0 0.0
    %69 = vmatprep.subr.mxu0 0.0
    %70 = vmatpush1.msra.mxu0 0.0
    %71 = vmatprep.subr.mxu0 0.0
    %72 = vmatpush1.msra.mxu0 0.0
    %73 = vmatprep.subr.mxu0 0.0
    %74 = vmatpush1.msra.mxu0 0.0
    %75 = vmatprep.subr.mxu0 0.0
    %76 = vmatpush1.msra.mxu0 0.0
    %77 = vmatprep.subr.mxu0 0.0
    %78 = vmatpush1.msra.mxu0 0.0
    %79 = vmatprep.subr.mxu0 0.0
    %80 = vmatpush1.msra.mxu0 0.0
    %81 = vmatprep.subr.mxu0 0.0
    %82 = vmatpush1.msra.mxu0 0.0
    %83 = vmatprep.subr.mxu0 0.0
    %84 = vmatpush1.msra.mxu0 0.0
    %85 = vmatprep.subr.mxu0 0.0
    %86 = vmatpush1.msra.mxu0 0.0
    %87 = vmatprep.subr.mxu0 0.0
    %88 = vmatpush1.msra.mxu0 0.0
    %89 = vmatprep.subr.mxu0 0.0
    %90 = vmatpush1.msra.mxu0 0.0
    %91 = vmatprep.subr.mxu0 0.0
    %92 = vmatpush1.msra.mxu0 0.0
    %93 = vmatprep.subr.mxu0 0.0
    %94 = vmatpush1.msra.mxu0 0.0
    %95 = vmatprep.subr.mxu0 0.0
    %96 = vmatpush1.msra.mxu0 0.0
    %97 = vmatprep.subr.mxu0 0.0
    %98 = vmatpush1.msra.mxu0 0.0
    %99 = vmatprep.subr.mxu0 0.0
    %100 = vmatpush1.msra.mxu0 0.0
    %101 = vmatprep.mubr.f32.mxu0 0.0
    %102 = vmatmul.mubr.f32.gmra.mrb[0].mxu0 %v35
    %v103 = vpop.f32.mrb[0].mxu0
    %v104 = vadd.f32 %v31, %v103
    %v105 = vpop.f32.mrb[0].mxu0
    %106 = vdwg.mxu0
    %v107 = vmax.f32 %v104, 0.0
    %v108 = vld [vmem:[%s3] sm:$0xff]
    %v109 = vld [vmem:[%s3 + $0x8] sm:$0xff]
    %v110 = vld [vmem:[%s3 + $0x10] sm:$0xff]
    %v111 = vld [vmem:[%s3 + $0x18] sm:$0xff]
    %v112 = vld [vmem:[%s3 + $0x20] sm:$0xff]
    %v113 = vld [vmem:[%s3 + $0x28] sm:$0xff]
    %v114 = vld [vmem:[%s3 + $0x30] sm:$0xff]
    %v115 = vld [vmem:[%s3 + $0x38] sm:$0xff]
    %v116 = vld [vmem:[%s3 + $0x40] sm:$0xff]
    %v117 = vld [vmem:[%s3 + $0x48] sm:$0xff]
    %v118 = vld [vmem:[%s3 + $0x50] sm:$0xff]
    %v119 = vld [vmem:[%s3 + $0x58] sm:$0xff]
    %v120 = vld [vmem:[%s3 + $0x60] sm:$0xff]
    %v121 = vld [vmem:[%s3 + $0x68] sm:$0xff]
    %v122 = vld [vmem:[%s3 + $0x70] sm:$0xff]
    %v123 = vld [vmem:[%s3 + $0x78] sm:$0xff]
    %v124 = vld [vmem:[%s4] sm:$0x1]
    %v126 = vlaneseq
    %v127 = vshrl.u32 %v126, 7
    %v128 = vsub.s32 0, %v127
    %v129 = vrot.slane %v124, %v128
    %131 = vmatprep.subr.mxu0 0.0
    %132 = vmatpush1.msra.mxu0 %v108
    %133 = vmatprep.subr.mxu0 0.0
    %134 = vmatpush1.msra.mxu0 %v109
    %135 = vmatprep.subr.mxu0 0.0
    %136 = vmatpush1.msra.mxu0 %v110
    %137 = vmatprep.subr.mxu0 0.0
    %138 = vmatpush1.msra.mxu0 %v111
    %139 = vmatprep.subr.mxu0 0.0
    %140 = vmatpush1.msra.mxu0 %v112
    %141 = vmatprep.subr.mxu0 0.0
    %142 = vmatpush1.msra.mxu0 %v113
    %143 = vmatprep.subr.mxu0 0.0
    %144 = vmatpush1.msra.mxu0 %v114
    %145 = vmatprep.subr.mxu0 0.0
    %146 = vmatpush1.msra.mxu0 %v115
    %147 = vmatprep.subr.mxu0 0.0
    %148 = vmatpush1.msra.mxu0 %v116
    %149 = vmatprep.subr.mxu0 0.0
    %150 = vmatpush1.msra.mxu0 %v117
    %151 = vmatprep.subr.mxu0 0.0
    %152 = vmatpush1.msra.mxu0 %v118
    %153 = vmatprep.subr.mxu0 0.0
    %154 = vmatpush1.msra.mxu0 %v119
    %155 = vmatprep.subr.mxu0 0.0
    %156 = vmatpush1.msra.mxu0 %v120
    %157 = vmatprep.subr.mxu0 0.0
    %158 = vmatpush1.msra.mxu0 %v121
    %159 = vmatprep.subr.mxu0 0.0
    %160 = vmatpush1.msra.mxu0 %v122
    %161 = vmatprep.subr.mxu0 0.0
    %162 = vmatpush1.msra.mxu0 %v123
    %163 = vmatprep.subr.mxu0 0.0
    %164 = vmatpush1.msra.mxu0 0.0
    %165 = vmatprep.subr.mxu0 0.0
    %166 = vmatpush1.msra.mxu0 0.0
    %167 = vmatprep.subr.mxu0 0.0
    %168 = vmatpush1.msra.mxu0 0.0
    %169 = vmatprep.subr.mxu0 0.0
    %170 = vmatpush1.msra.mxu0 0.0
    %171 = vmatprep.subr.mxu0 0.0
    %172 = vmatpush1.msra.mxu0 0.0
    %173 = vmatprep.subr.mxu0 0.0
    %174 = vmatpush1.msra.mxu0 0.0
    %175 = vmatprep.subr.mxu0 0.0
    %176 = vmatpush1.msra.mxu0 0.0
    %177 = vmatprep.subr.mxu0 0.0
    %178 = vmatpush1.msra.mxu0 0.0
    %179 = vmatprep.subr.mxu0 0.0
    %180 = vmatpush1.msra.mxu0 0.0
    %181 = vmatprep.subr.mxu0 0.0
    %182 = vmatpush1.msra.mxu0 0.0
    %183 = vmatprep.subr.mxu0 0.0
    %184 = vmatpush1.msra.mxu0 0.0
    %185 = vmatprep.subr.mxu0 0.0
    %186 = vmatpush1.msra.mxu0 0.0
    %187 = vmatprep.subr.mxu0 0.0
    %188 = vmatpush1.msra.mxu0 0.0
    %189 = vmatprep.subr.mxu0 0.0
    %190 = vmatpush1.msra.mxu0 0.0
    %191 = vmatprep.subr.mxu0 0.0
    %192 = vmatpush1.msra.mxu0 0.0
    %193 = vmatprep.subr.mxu0 0.0
    %194 = vmatpush1.msra.mxu0 0.0
    %195 = vmatprep.mubr.f32.mxu0 0.0
    %196 = vmatmul.mubr.f32.gmra.mrb[0].mxu0 %v107
    %v197 = vpop.f32.mrb[0].mxu0
    %v198 = vadd.f32 %v129, %v197
    %v199 = vpop.f32.mrb[0].mxu0
    %200 = vdwg.mxu0
    %vm201 = vcmask 130048
    %202 = vst.msk [vmem:[#allocation2] sm:$0xff] %vm201, %v198
    // Predicated region
    $region22: #{tpu_custom_call.1} parent=1 // pred_check
      _
    $region23: #{tpu_custom_call.1} parent=1 // pred_check_branch
      %204 = sbr.rel (0) target = $region25
    $region24: #{tpu_custom_call.1} parent=1 // pred_region
      %s206 = ssub.s32 128, 128
      %207 = vsyncadd [#allocation3], %s206
      %s209 = sshll.u32 [#allocation2], 4
      %s210 = int_to_ptr.vmem [resolvable:$true] %s209
      %212 = dma.vmem_to_hbm [thread:$0]  %s210, 128, %s5, [#allocation3]
    $region25: #{tpu_custom_call.1} parent=1 // pred_fallthru
      _
    // Predicated region
    $region26: #{tpu_custom_call.1} parent=1 // pred_check
      _
    $region27: #{tpu_custom_call.1} parent=1 // pred_check_branch
      %214 = sbr.rel (0) target = $region29
    $region28: #{tpu_custom_call.1} parent=1 // pred_region
      %215 = dma.done [#allocation3], 128
    $region29: #{tpu_custom_call.1} parent=1 // pred_fallthru
      _
    %216 = vsyncpa [#allocation3], 1

</llo_original>
